<compile_context>
chip_gen: v5e
topology: v5e:2x2
jax: 0.10.0
libtpu: 0.0.40
codegen_flags: <defaults>
</compile_context>

<pallas_src>
import functools

import jax
import jax.numpy as jnp
from jax import lax
from jax.experimental import pallas as pl
from jax.experimental.pallas import tpu as pltpu


def _round_up(x, m):
    return (x + m - 1) // m * m


# --------------------------------------------------------------------------
# Kernel: one (batch, cout-tile) grid step.
#   x_ref : (2, 2, Cin, Lplane)  bf16  stride-2 phase planes, flattened spatial
#   p_ref : (Cout_t, tn)         f32   lateral feature P (junk col + lane pad)
#   w_ref : (3, 3, Cout_t, Cin)  bf16  conv3x3 weight, tap-major
#   o_ref : (Cout_t, tn)         f32   output = 2 * (conv3x3(N) + P)
# --------------------------------------------------------------------------
def _botblock_sa_kernel(x_ref, p_ref, w_ref, o_ref, *, wg, tn):
    # Fused "+P": accumulator starts at P instead of zeros (saves a VPU pass).
    acc = p_ref[...]

    # Load the four stride-2 phase planes once; every 3x3 tap is then a dense,
    # statically shifted lane slice -> one (Cout_t,Cin)x(Cin,tn) MXU matmul.
    phases = [[x_ref[0, 0], x_ref[0, 1]],
              [x_ref[1, 0], x_ref[1, 1]]]

    for ky in range(3):                       # static 9-tap unroll (LLO-visible)
        for kx in range(3):
            shift = (ky >> 1) * wg + (kx >> 1)
            rhs = phases[ky & 1][kx & 1][:, shift:shift + tn]     # (Cin, tn)
            w_tap = w_ref[ky, kx]                                 # (Cout_t, Cin)
            acc = acc + jnp.dot(w_tap, rhs,
                                preferred_element_type=jnp.float32)

    # softmax over a size-1 channel dim == 1.0 exactly -> sa*out + out == 2*out
    o_ref[...] = acc + acc


# --------------------------------------------------------------------------
# Wrapper: one space-to-depth layout pass (pure data movement, ~1x of N bytes);
# all arithmetic lives in the kernel.
# --------------------------------------------------------------------------
def botblock_sa(N, P, params, *, compute_dtype=jnp.bfloat16):
    B, Cin, H, W = N.shape
    Cout = params["w3"].shape[0]
    Ho, Wo = (H + 1) // 2, (W + 1) // 2

    wg = Wo + 1                                   # output row width incl. 1 junk column
    l_out = Ho * wg
    tn = _round_up(l_out, 128)                    # lane-dense output width
    l_plane = _round_up(tn + wg + 1, 128)         # max tap shift = wg + 1

    # stride-2 space-to-depth: phase[py,px][b,ci,i,j] = Npad[b,ci,2i+py,2j+px]
    hp, wp = 2 * (Ho + 1), 2 * (Wo + 1)
    Np = jnp.pad(N, ((0, 0), (0, 0), (1, hp - 1 - H), (1, wp - 1 - W)))
    ph = Np.reshape(B, Cin, Ho + 1, 2, Wo + 1, 2).transpose(0, 3, 5, 1, 2, 4)
    ph = ph.reshape(B, 2, 2, Cin, (Ho + 1) * (Wo + 1))
    ph = jnp.pad(ph, ((0, 0),) * 4 + ((0, l_plane - (Ho + 1) * (Wo + 1)),))
    ph = ph.astype(compute_dtype)                 # bf16 MXU operand

    # P: add the junk column + lane pad; stays f32 (feeds the f32 accumulator).
    Pf = jnp.pad(P, ((0, 0), (0, 0), (0, 0), (0, wg - Wo))).reshape(B, Cout, l_out)
    Pf = jnp.pad(Pf, ((0, 0), (0, 0), (0, tn - l_out))).astype(jnp.float32)

    # conv3x3 weight, tap-major, bf16 for the MXU.
    w3t = jnp.transpose(params["w3"], (2, 3, 0, 1)).astype(compute_dtype)

    t_co = 256 if Cout % 256 == 0 else Cout       # Cout tile (full at toy size)
    n_co = Cout // t_co

    kernel = functools.partial(_botblock_sa_kernel, wg=wg, tn=tn)
    out_flat = pl.pallas_call(
        kernel,
        out_shape=jax.ShapeDtypeStruct((B, Cout, tn), jnp.float32),
        grid=(B, n_co),
        in_specs=[
            pl.BlockSpec((pl.Squeezed(), 2, 2, Cin, l_plane),
                         lambda b, co: (b, 0, 0, 0, 0)),
            pl.BlockSpec((pl.Squeezed(), t_co, tn), lambda b, co: (b, co, 0)),
            # weight index_map ignores b -> block stays VMEM-resident across batch
            pl.BlockSpec((3, 3, t_co, Cin), lambda b, co: (0, 0, co, 0)),
        ],
        out_specs=pl.BlockSpec((pl.Squeezed(), t_co, tn), lambda b, co: (b, co, 0)),
        compiler_params=pltpu.CompilerParams(
            dimension_semantics=("parallel", "parallel"),
            vmem_limit_bytes=48 * 1024 * 1024,
        ),
    )(ph, Pf, w3t)

    # drop lane padding and the junk column (metadata-ish slice/reshape).
    return out_flat[:, :, :l_out].reshape(B, Cout, Ho, wg)[..., :Wo]


# --------------------------------------------------------------------------
# Deterministic parameter init (shapes from the module's __init__).
# NOTE: Botblock_SA.conv1x1 / bn / relu are created but never used in forward().
# The SAttModule params are kept for the reference even though the channel
# softmax over a single channel makes them mathematically inert.
# --------------------------------------------------------------------------
def init_params(key, c_in, c_out):
    ks = jax.random.split(key, 5)
    return dict(
        w3=jax.random.normal(ks[0], (c_out, c_in, 3, 3), jnp.float32) * 0.1,  # conv3x3
        ws1=jax.random.normal(ks[1], (c_in,), jnp.float32) * 0.1,             # SAtt conv_to_1 w
        bs1=jax.random.normal(ks[2], (), jnp.float32) * 0.1,                  # SAtt conv_to_1 b
        ws2=jax.random.normal(ks[3], (), jnp.float32) * 0.1,                  # SAtt 1x1 (1->1) w
        bs2=jax.random.normal(ks[4], (), jnp.float32) * 0.1,                  # SAtt 1x1 (1->1) b
    )


# --------------------------------------------------------------------------
# Pure-JAX reference (full forward, including the inert spatial-attention
# branch).  Conv operands are routed through bf16 to match the kernel's MXU
# input precision; accumulation is f32 in both.
# --------------------------------------------------------------------------
def ref_botblock_sa(N, P, pr, compute_dtype=jnp.bfloat16):
    w = pr["w3"].astype(compute_dtype).astype(jnp.float32)
    Nc = N.astype(compute_dtype).astype(jnp.float32)
    x = lax.conv_general_dilated(
        Nc, w, window_strides=(2, 2), padding=((1, 1), (1, 1)),
        dimension_numbers=("NCHW", "OIHW", "NCHW"),
        precision=lax.Precision.HIGHEST)
    out = x + P
    s = jnp.einsum("c,bchw->bhw", pr["ws1"], out)[:, None, :, :] + pr["bs1"]
    s = s * pr["ws2"] + pr["bs2"]
    sa = jax.nn.softmax(s, axis=1)          # size-1 channel dim -> exactly 1.0
    return sa * out + out


if __name__ == "__main__":
    B, Cin, Cout, H, W = 2, 4, 4, 16, 16
    Ho, Wo = (H + 1) // 2, (W + 1) // 2

    key = jax.random.PRNGKey(0)
    kN, kP, kw = jax.random.split(key, 3)
    N = jax.random.normal(kN, (B, Cin, H, W), jnp.float32)
    P = jax.random.normal(kP, (B, Cout, Ho, Wo), jnp.float32)
    params = init_params(kw, Cin, Cout)

    out = jax.block_until_ready(botblock_sa(N, P, params))
    ref = jax.block_until_ready(ref_botblock_sa(N, P, params))

    assert out.shape == ref.shape
    assert jnp.allclose(out, ref, atol=1e-4, rtol=1e-4), \
        f"mismatch vs reference, max abs err {float(jnp.max(jnp.abs(out - ref)))}"

    print("KERNEL_OK")
</pallas_src>

<mosaic_0001>
module attributes {stable_mosaic.version = 11 : i64} {
  func.func @_botblock_sa_kernel(%arg0: i32, %arg1: i32, %arg2: memref<1x2x2x4x256xbf16, #tpu.memory_space<vmem>>, %arg3: memref<1x4x128xf32, #tpu.memory_space<vmem>>, %arg4: memref<3x3x4x4xbf16, #tpu.memory_space<vmem>>, %arg5: memref<1x4x128xf32, #tpu.memory_space<vmem>>) attributes {dimension_semantics = [#tpu.dimension_semantics<parallel>, #tpu.dimension_semantics<parallel>], iteration_bounds = array<i64: 2, 1>, scalar_prefetch = 0 : i64, scratch_operands = 0 : i64, tpu.core_type = #tpu.core_type<tc>, window_params = [{transform_indices = @transform_0, window_bounds = array<i64: 1, 2, 2, 4, 256>}, {transform_indices = @transform_1, window_bounds = array<i64: 1, 4, 128>}, {transform_indices = @transform_2, window_bounds = array<i64: 3, 3, 4, 4>}, {transform_indices = @transform_3, window_bounds = array<i64: 1, 4, 128>}]} {
    %c0 = arith.constant 0 : index
    %c0_0 = arith.constant 0 : index
    %c0_1 = arith.constant 0 : index
    %0 = vector.load %arg3[%c0, %c0_0, %c0_1] : memref<1x4x128xf32, #tpu.memory_space<vmem>>, vector<1x4x128xf32>
    %1 = vector.shape_cast %0 : vector<1x4x128xf32> to vector<4x128xf32>
    %c0_2 = arith.constant 0 : index
    %c0_3 = arith.constant 0 : index
    %c0_4 = arith.constant 0 : index
    %c0_5 = arith.constant 0 : index
    %c0_6 = arith.constant 0 : index
    %2 = vector.load %arg2[%c0_2, %c0_3, %c0_4, %c0_5, %c0_6] : memref<1x2x2x4x256xbf16, #tpu.memory_space<vmem>>, vector<1x1x1x4x256xbf16>
    %3 = vector.shape_cast %2 : vector<1x1x1x4x256xbf16> to vector<4x256xbf16>
    %c0_7 = arith.constant 0 : index
    %c0_8 = arith.constant 0 : index
    %c1 = arith.constant 1 : index
    %c0_9 = arith.constant 0 : index
    %c0_10 = arith.constant 0 : index
    %4 = vector.load %arg2[%c0_7, %c0_8, %c1, %c0_9, %c0_10] : memref<1x2x2x4x256xbf16, #tpu.memory_space<vmem>>, vector<1x1x1x4x256xbf16>
    %5 = vector.shape_cast %4 : vector<1x1x1x4x256xbf16> to vector<4x256xbf16>
    %c0_11 = arith.constant 0 : index
    %c1_12 = arith.constant 1 : index
    %c0_13 = arith.constant 0 : index
    %c0_14 = arith.constant 0 : index
    %c0_15 = arith.constant 0 : index
    %6 = vector.load %arg2[%c0_11, %c1_12, %c0_13, %c0_14, %c0_15] : memref<1x2x2x4x256xbf16, #tpu.memory_space<vmem>>, vector<1x1x1x4x256xbf16>
    %7 = vector.shape_cast %6 : vector<1x1x1x4x256xbf16> to vector<4x256xbf16>
    %c0_16 = arith.constant 0 : index
    %c1_17 = arith.constant 1 : index
    %c1_18 = arith.constant 1 : index
    %c0_19 = arith.constant 0 : index
    %c0_20 = arith.constant 0 : index
    %8 = vector.load %arg2[%c0_16, %c1_17, %c1_18, %c0_19, %c0_20] : memref<1x2x2x4x256xbf16, #tpu.memory_space<vmem>>, vector<1x1x1x4x256xbf16>
    %9 = vector.shape_cast %8 : vector<1x1x1x4x256xbf16> to vector<4x256xbf16>
    %10 = vector.extract_strided_slice %3 {offsets = [0, 0], sizes = [4, 128], strides = [1, 1]} : vector<4x256xbf16> to vector<4x128xbf16>
    %c0_21 = arith.constant 0 : index
    %c0_22 = arith.constant 0 : index
    %c0_23 = arith.constant 0 : index
    %c0_24 = arith.constant 0 : index
    %11 = vector.load %arg4[%c0_21, %c0_22, %c0_23, %c0_24] : memref<3x3x4x4xbf16, #tpu.memory_space<vmem>>, vector<1x1x4x4xbf16>
    %12 = vector.shape_cast %11 : vector<1x1x4x4xbf16> to vector<4x4xbf16>
    %cst = arith.constant dense<0.000000e+00> : vector<4x128xf32>
    %13 = tpu.matmul %12, %10, %cst {dimension_numbers = #tpu.dot_dimension_numbers<[1], [0], [0], [1], [0, 0, 1, 1], [], []>} : vector<4x4xbf16>, vector<4x128xbf16>, vector<4x128xf32> -> vector<4x128xf32>
    %14 = arith.addf %1, %13 : vector<4x128xf32>
    %15 = vector.extract_strided_slice %5 {offsets = [0, 0], sizes = [4, 128], strides = [1, 1]} : vector<4x256xbf16> to vector<4x128xbf16>
    %c0_25 = arith.constant 0 : index
    %c1_26 = arith.constant 1 : index
    %c0_27 = arith.constant 0 : index
    %c0_28 = arith.constant 0 : index
    %16 = vector.load %arg4[%c0_25, %c1_26, %c0_27, %c0_28] : memref<3x3x4x4xbf16, #tpu.memory_space<vmem>>, vector<1x1x4x4xbf16>
    %17 = vector.shape_cast %16 : vector<1x1x4x4xbf16> to vector<4x4xbf16>
    %cst_29 = arith.constant dense<0.000000e+00> : vector<4x128xf32>
    %18 = tpu.matmul %17, %15, %cst_29 {dimension_numbers = #tpu.dot_dimension_numbers<[1], [0], [0], [1], [0, 0, 1, 1], [], []>} : vector<4x4xbf16>, vector<4x128xbf16>, vector<4x128xf32> -> vector<4x128xf32>
    %19 = arith.addf %14, %18 : vector<4x128xf32>
    %20 = vector.extract_strided_slice %3 {offsets = [0, 1], sizes = [4, 128], strides = [1, 1]} : vector<4x256xbf16> to vector<4x128xbf16>
    %c0_30 = arith.constant 0 : index
    %c2 = arith.constant 2 : index
    %c0_31 = arith.constant 0 : index
    %c0_32 = arith.constant 0 : index
    %21 = vector.load %arg4[%c0_30, %c2, %c0_31, %c0_32] : memref<3x3x4x4xbf16, #tpu.memory_space<vmem>>, vector<1x1x4x4xbf16>
    %22 = vector.shape_cast %21 : vector<1x1x4x4xbf16> to vector<4x4xbf16>
    %cst_33 = arith.constant dense<0.000000e+00> : vector<4x128xf32>
    %23 = tpu.matmul %22, %20, %cst_33 {dimension_numbers = #tpu.dot_dimension_numbers<[1], [0], [0], [1], [0, 0, 1, 1], [], []>} : vector<4x4xbf16>, vector<4x128xbf16>, vector<4x128xf32> -> vector<4x128xf32>
    %24 = arith.addf %19, %23 : vector<4x128xf32>
    %25 = vector.extract_strided_slice %7 {offsets = [0, 0], sizes = [4, 128], strides = [1, 1]} : vector<4x256xbf16> to vector<4x128xbf16>
    %c1_34 = arith.constant 1 : index
    %c0_35 = arith.constant 0 : index
    %c0_36 = arith.constant 0 : index
    %c0_37 = arith.constant 0 : index
    %26 = vector.load %arg4[%c1_34, %c0_35, %c0_36, %c0_37] : memref<3x3x4x4xbf16, #tpu.memory_space<vmem>>, vector<1x1x4x4xbf16>
    %27 = vector.shape_cast %26 : vector<1x1x4x4xbf16> to vector<4x4xbf16>
    %cst_38 = arith.constant dense<0.000000e+00> : vector<4x128xf32>
    %28 = tpu.matmul %27, %25, %cst_38 {dimension_numbers = #tpu.dot_dimension_numbers<[1], [0], [0], [1], [0, 0, 1, 1], [], []>} : vector<4x4xbf16>, vector<4x128xbf16>, vector<4x128xf32> -> vector<4x128xf32>
    %29 = arith.addf %24, %28 : vector<4x128xf32>
    %30 = vector.extract_strided_slice %9 {offsets = [0, 0], sizes = [4, 128], strides = [1, 1]} : vector<4x256xbf16> to vector<4x128xbf16>
    %c1_39 = arith.constant 1 : index
    %c1_40 = arith.constant 1 : index
    %c0_41 = arith.constant 0 : index
    %c0_42 = arith.constant 0 : index
    %31 = vector.load %arg4[%c1_39, %c1_40, %c0_41, %c0_42] : memref<3x3x4x4xbf16, #tpu.memory_space<vmem>>, vector<1x1x4x4xbf16>
    %32 = vector.shape_cast %31 : vector<1x1x4x4xbf16> to vector<4x4xbf16>
    %cst_43 = arith.constant dense<0.000000e+00> : vector<4x128xf32>
    %33 = tpu.matmul %32, %30, %cst_43 {dimension_numbers = #tpu.dot_dimension_numbers<[1], [0], [0], [1], [0, 0, 1, 1], [], []>} : vector<4x4xbf16>, vector<4x128xbf16>, vector<4x128xf32> -> vector<4x128xf32>
    %34 = arith.addf %29, %33 : vector<4x128xf32>
    %35 = vector.extract_strided_slice %7 {offsets = [0, 1], sizes = [4, 128], strides = [1, 1]} : vector<4x256xbf16> to vector<4x128xbf16>
    %c1_44 = arith.constant 1 : index
    %c2_45 = arith.constant 2 : index
    %c0_46 = arith.constant 0 : index
    %c0_47 = arith.constant 0 : index
    %36 = vector.load %arg4[%c1_44, %c2_45, %c0_46, %c0_47] : memref<3x3x4x4xbf16, #tpu.memory_space<vmem>>, vector<1x1x4x4xbf16>
    %37 = vector.shape_cast %36 : vector<1x1x4x4xbf16> to vector<4x4xbf16>
    %cst_48 = arith.constant dense<0.000000e+00> : vector<4x128xf32>
    %38 = tpu.matmul %37, %35, %cst_48 {dimension_numbers = #tpu.dot_dimension_numbers<[1], [0], [0], [1], [0, 0, 1, 1], [], []>} : vector<4x4xbf16>, vector<4x128xbf16>, vector<4x128xf32> -> vector<4x128xf32>
    %39 = arith.addf %34, %38 : vector<4x128xf32>
    %40 = vector.extract_strided_slice %3 {offsets = [0, 9], sizes = [4, 128], strides = [1, 1]} : vector<4x256xbf16> to vector<4x128xbf16>
    %c2_49 = arith.constant 2 : index
    %c0_50 = arith.constant 0 : index
    %c0_51 = arith.constant 0 : index
    %c0_52 = arith.constant 0 : index
    %41 = vector.load %arg4[%c2_49, %c0_50, %c0_51, %c0_52] : memref<3x3x4x4xbf16, #tpu.memory_space<vmem>>, vector<1x1x4x4xbf16>
    %42 = vector.shape_cast %41 : vector<1x1x4x4xbf16> to vector<4x4xbf16>
    %cst_53 = arith.constant dense<0.000000e+00> : vector<4x128xf32>
    %43 = tpu.matmul %42, %40, %cst_53 {dimension_numbers = #tpu.dot_dimension_numbers<[1], [0], [0], [1], [0, 0, 1, 1], [], []>} : vector<4x4xbf16>, vector<4x128xbf16>, vector<4x128xf32> -> vector<4x128xf32>
    %44 = arith.addf %39, %43 : vector<4x128xf32>
    %45 = vector.extract_strided_slice %5 {offsets = [0, 9], sizes = [4, 128], strides = [1, 1]} : vector<4x256xbf16> to vector<4x128xbf16>
    %c2_54 = arith.constant 2 : index
    %c1_55 = arith.constant 1 : index
    %c0_56 = arith.constant 0 : index
    %c0_57 = arith.constant 0 : index
    %46 = vector.load %arg4[%c2_54, %c1_55, %c0_56, %c0_57] : memref<3x3x4x4xbf16, #tpu.memory_space<vmem>>, vector<1x1x4x4xbf16>
    %47 = vector.shape_cast %46 : vector<1x1x4x4xbf16> to vector<4x4xbf16>
    %cst_58 = arith.constant dense<0.000000e+00> : vector<4x128xf32>
    %48 = tpu.matmul %47, %45, %cst_58 {dimension_numbers = #tpu.dot_dimension_numbers<[1], [0], [0], [1], [0, 0, 1, 1], [], []>} : vector<4x4xbf16>, vector<4x128xbf16>, vector<4x128xf32> -> vector<4x128xf32>
    %49 = arith.addf %44, %48 : vector<4x128xf32>
    %50 = vector.extract_strided_slice %3 {offsets = [0, 10], sizes = [4, 128], strides = [1, 1]} : vector<4x256xbf16> to vector<4x128xbf16>
    %c2_59 = arith.constant 2 : index
    %c2_60 = arith.constant 2 : index
    %c0_61 = arith.constant 0 : index
    %c0_62 = arith.constant 0 : index
    %51 = vector.load %arg4[%c2_59, %c2_60, %c0_61, %c0_62] : memref<3x3x4x4xbf16, #tpu.memory_space<vmem>>, vector<1x1x4x4xbf16>
    %52 = vector.shape_cast %51 : vector<1x1x4x4xbf16> to vector<4x4xbf16>
    %cst_63 = arith.constant dense<0.000000e+00> : vector<4x128xf32>
    %53 = tpu.matmul %52, %50, %cst_63 {dimension_numbers = #tpu.dot_dimension_numbers<[1], [0], [0], [1], [0, 0, 1, 1], [], []>} : vector<4x4xbf16>, vector<4x128xbf16>, vector<4x128xf32> -> vector<4x128xf32>
    %54 = arith.addf %49, %53 : vector<4x128xf32>
    %55 = arith.addf %54, %54 : vector<4x128xf32>
    %c0_64 = arith.constant 0 : index
    %c0_65 = arith.constant 0 : index
    %c0_66 = arith.constant 0 : index
    %56 = vector.load %arg5[%c0_64, %c0_65, %c0_66] : memref<1x4x128xf32, #tpu.memory_space<vmem>>, vector<1x4x128xf32>
    %57 = vector.shape_cast %56 : vector<1x4x128xf32> to vector<4x128xf32>
    %58 = vector.shape_cast %55 : vector<4x128xf32> to vector<1x4x128xf32>
    tpu.vector_store %arg5[%c0_64, %c0_65, %c0_66], %58 {strides = array<i32>} : memref<1x4x128xf32, #tpu.memory_space<vmem>>, vector<1x4x128xf32>,
    return
  }
  func.func @transform_0(%arg0: i32, %arg1: i32) -> (i32, i32, i32, i32, i32) {
    %c0_i32 = arith.constant 0 : i32
    %c0_i32_0 = arith.constant 0 : i32
    %c0_i32_1 = arith.constant 0 : i32
    %c0_i32_2 = arith.constant 0 : i32
    %c0_i32_3 = arith.constant 0 : i32
    return %arg0, %c0_i32, %c0_i32_0, %c0_i32_1, %c0_i32_2 : i32, i32, i32, i32, i32
  }
  func.func @transform_1(%arg0: i32, %arg1: i32) -> (i32, i32, i32) {
    %c0_i32 = arith.constant 0 : i32
    %c0_i32_0 = arith.constant 0 : i32
    return %arg0, %arg1, %c0_i32 : i32, i32, i32
  }
  func.func @transform_2(%arg0: i32, %arg1: i32) -> (i32, i32, i32, i32) {
    %c0_i32 = arith.constant 0 : i32
    %c0_i32_0 = arith.constant 0 : i32
    %c0_i32_1 = arith.constant 0 : i32
    %c0_i32_2 = arith.constant 0 : i32
    return %c0_i32, %c0_i32_0, %arg1, %c0_i32_1 : i32, i32, i32, i32
  }
  func.func @transform_3(%arg0: i32, %arg1: i32) -> (i32, i32, i32) {
    %c0_i32 = arith.constant 0 : i32
    %c0_i32_0 = arith.constant 0 : i32
    return %arg0, %arg1, %c0_i32 : i32, i32, i32
  }
}

</mosaic_0001>

<llo_original>
// kernel: tpu_custom_call.1
$region0: #{tpu_custom_call.1}
  #allocation0 [shape = 'u32[]', space=smem, size = 0x4, offset = 0x4, fixed_abs, tag = 'smem constant byte address 0x4 - core index']
  #allocation1 [shape = 'u32[72,128]{1,0:T(1,128)}', space=vmem, size = 0x9000, scoped, tag = 'internal scratch']
  %s0 = inlined_call_operand.hbm [shape: bf16[2,2,2,4,256], index: 0, kind: input, shape index: {}]
  %s1 = inlined_call_operand.hbm [shape: f32[2,4,128], index: 1, kind: input, shape index: {}]
  %s2 = inlined_call_operand.hbm [shape: bf16[3,3,4,4], index: 2, kind: input, shape index: {}]
  %s3 = inlined_call_operand.hbm [shape: f32[2,4,128], index: 3, kind: output, shape index: {}]
  %s4 = sld [smem:[#allocation0]]
  $region57: #{tpu_custom_call.1} parent=0
    _
  %s6 = ssub.s32 1, %s4
  %s7 = scalar_select 0, %s6, %s4
  $region1: #{tpu_custom_call.1} parent=0
    #allocation2 [shape = 'u8[16384]{0}', space=vmem, size = 0x4000, scoped, tag = 'input window, operand 0']
    #allocation3 [shape = 's32[2]{0}', space=sflag, size = 0x8, scoped, tag = 'scoped memory for tpu_custom_call.1']
    #allocation4 [shape = 's32[2]{0}', space=sflag, size = 0x8, scoped, tag = 'scoped memory for tpu_custom_call.1']
    #allocation5 [shape = 'u8[4096]{0}', space=vmem, size = 0x1000, scoped, tag = 'input window, operand 1']
    #allocation6 [shape = 's32[2]{0}', space=sflag, size = 0x8, scoped, tag = 'scoped memory for tpu_custom_call.1']
    #allocation7 [shape = 'u8[9216]{0}', space=vmem, size = 0x2400, scoped, tag = 'input window, operand 2, single buffered']
    #allocation8 [shape = 'u8[4096]{0}', space=vmem, size = 0x1000, scoped, tag = 'output window, operand 0']
    %8 = vsyncpa [#allocation3], 0
    %s9 = scalar_lea.sflag [#allocation3], 1
    %10 = vsyncpa %s9, 0
    %11 = vsyncpa [#allocation6], 0
    %s12 = scalar_lea.sflag [#allocation6], 1
    %13 = vsyncpa %s12, 0
    %14 = vsyncpa [#allocation4], 0
    %s15 = scalar_lea.sflag [#allocation4], 1
    %16 = vsyncpa %s15, 0
    loop: start=0, step=1, limit=4
    $region2: #{tpu_custom_call.1} parent=1 // loop_pre_header
      _
    $region3: #{tpu_custom_call.1} parent=1 // loop_header
      %s18 = sphi 0, %s22
      %p19 = scmp.ge.s32.totalorder %s18, 4
      %s25 = sphi 0, %s37
      %s26 = sphi 0, %s33
      %s27 = sphi 0, %s25
      %s28 = sphi 0, %s26
      %s29 = sphi 0, %s27
      %s30 = sphi 0, %s28
      %s40 = sphi 0, %s42
      %s43 = sphi 0, %s40
      %s44 = sphi 0, %s43
      %s60 = sphi 0, %s44
      %s68 = sphi 0, %s70
      %s71 = sphi 0, %s68
      %s72 = sphi 0, %s71
      %s88 = sphi 0, %s72
      %s94 = sphi 0, %s96
      %s97 = sphi 0, %s94
      %s98 = sphi 0, %s97
      %s114 = sphi 0, %s98
      %s122 = sphi 0, %s124
      %s125 = sphi 0, %s122
      %s126 = sphi 0, %s125
      %s142 = sphi 0, %s126
    $region4: #{tpu_custom_call.1} parent=1 // loop_header_branch
      %21 = sbr.rel (%p19) target = $region8
    $region5: #{tpu_custom_call.1} parent=1 // loop_body
      %s23 = ssub.s32 %s18, 1
      %s24 = ssub.s32 %s18, 2
      %s31 = sadd.s32 1, %s26
      %p32 = scmp.ge.s32.totalorder %s31, 1
      %s33 = scalar_select %p32, 0, %s31
      %s34 = sadd.s32 1, %s25
      %s35 = scalar_select %p32, %s34, %s25
      %p36 = scmp.ge.s32.totalorder %s35, 2
      %s37 = scalar_select %p36, 0, %s35
      %s38 = ssub.s32 %s25, %s37
      %p39 = scmp.eq.s32.totalorder %s38, 0
      %s41 = sadd.s32 %s40, 1
      %s42 = scalar_select %p39, %s40, %s41
      %p45 = pneg %p39
      %p46 = scmp.eq.s32.totalorder %s18, 1
      %p47 = por %p45, %p46
      %p48 = scmp.ne.s32.totalorder %s40, %s43
      %p49 = scmp.eq.s32.totalorder %s18, 0
      %p50 = por %p48, %p49
      %p51 = scmp.ne.s32.totalorder %s40, %s43
      %p52 = scmp.eq.s32.totalorder %s23, 1
      %p53 = por %p51, %p52
      %p54 = scmp.ne.s32.totalorder %s43, %s44
      %p55 = scmp.eq.s32.totalorder %s23, 0
      %p56 = por %p54, %p55
      %p57 = scmp.ne.s32.totalorder %s43, %s44
      %p58 = scmp.eq.s32.totalorder %s24, 1
      %p59 = por %p57, %p58
      %p61 = scmp.ne.s32.totalorder %s44, %s60
      %p62 = scmp.eq.s32.totalorder %s24, 0
      %p63 = por %p61, %p62
      %s64 = ssub.s32 %s25, %s37
      %s65 = ssub.s32 %s26, %s33
      %s66 = sor.u32 %s64, %s65
      %p67 = scmp.eq.s32.totalorder %s66, 0
      %s69 = sadd.s32 %s68, 1
      %s70 = scalar_select %p67, %s68, %s69
      %p73 = pneg %p67
      %p74 = scmp.eq.s32.totalorder %s18, 1
      %p75 = por %p73, %p74
      %p76 = scmp.ne.s32.totalorder %s68, %s71
      %p77 = scmp.eq.s32.totalorder %s18, 0
      %p78 = por %p76, %p77
      %p79 = scmp.ne.s32.totalorder %s68, %s71
      %p80 = scmp.eq.s32.totalorder %s23, 1
      %p81 = por %p79, %p80
      %p82 = scmp.ne.s32.totalorder %s71, %s72
      %p83 = scmp.eq.s32.totalorder %s23, 0
      %p84 = por %p82, %p83
      %p85 = scmp.ne.s32.totalorder %s71, %s72
      %p86 = scmp.eq.s32.totalorder %s24, 1
      %p87 = por %p85, %p86
      %p89 = scmp.ne.s32.totalorder %s72, %s88
      %p90 = scmp.eq.s32.totalorder %s24, 0
      %p91 = por %p89, %p90
      %s92 = ssub.s32 %s26, %s33
      %p93 = scmp.eq.s32.totalorder %s92, 0
      %s95 = sadd.s32 %s94, 1
      %s96 = scalar_select %p93, %s94, %s95
      %p99 = pneg %p93
      %p100 = scmp.eq.s32.totalorder %s18, 1
      %p101 = por %p99, %p100
      %p102 = scmp.ne.s32.totalorder %s94, %s97
      %p103 = scmp.eq.s32.totalorder %s18, 0
      %p104 = por %p102, %p103
      %p105 = scmp.ne.s32.totalorder %s94, %s97
      %p106 = scmp.eq.s32.totalorder %s23, 1
      %p107 = por %p105, %p106
      %p108 = scmp.ne.s32.totalorder %s97, %s98
      %p109 = scmp.eq.s32.totalorder %s23, 0
      %p110 = por %p108, %p109
      %p111 = scmp.ne.s32.totalorder %s97, %s98
      %p112 = scmp.eq.s32.totalorder %s24, 1
      %p113 = por %p111, %p112
      %p115 = scmp.ne.s32.totalorder %s98, %s114
      %p116 = scmp.eq.s32.totalorder %s24, 0
      %p117 = por %p115, %p116
      %s118 = ssub.s32 %s25, %s37
      %s119 = ssub.s32 %s26, %s33
      %s120 = sor.u32 %s118, %s119
      %p121 = scmp.eq.s32.totalorder %s120, 0
      %s123 = sadd.s32 %s122, 1
      %s124 = scalar_select %p121, %s122, %s123
      %p127 = pneg %p121
      %p128 = scmp.eq.s32.totalorder %s18, 1
      %p129 = por %p127, %p128
      %p130 = scmp.ne.s32.totalorder %s122, %s125
      %p131 = scmp.eq.s32.totalorder %s18, 0
      %p132 = por %p130, %p131
      %p133 = scmp.ne.s32.totalorder %s122, %s125
      %p134 = scmp.eq.s32.totalorder %s23, 1
      %p135 = por %p133, %p134
      %p136 = scmp.ne.s32.totalorder %s125, %s126
      %p137 = scmp.eq.s32.totalorder %s23, 0
      %p138 = por %p136, %p137
      %p139 = scmp.ne.s32.totalorder %s125, %s126
      %p140 = scmp.eq.s32.totalorder %s24, 1
      %p141 = por %p139, %p140
      %p143 = scmp.ne.s32.totalorder %s126, %s142
      %p144 = scmp.eq.s32.totalorder %s24, 0
      %p145 = por %p143, %p144
      %p146 = scmp.le.s32.totalorder 1, %s18
      %p147 = scmp.lt.s32.totalorder %s18, 3
      %p148 = pnand %p146, %p147
      %p149 = pneg %p148
      // Predicated region
      $region9: #{tpu_custom_call.1} parent=5 // pred_check
        _
      $region10: #{tpu_custom_call.1} parent=5 // pred_check_branch
        %151 = sbr.rel (%p148) target = $region12
      $region11: #{tpu_custom_call.1} parent=5 // pred_region
        %s152 = ssub.s32 %s18, 1
        // Predicated region
        $region13: #{tpu_custom_call.1} parent=11 // pred_check
          %p153 = pneg %p110
        $region14: #{tpu_custom_call.1} parent=11 // pred_check_branch
          %155 = sbr.rel (%p153) target = $region16
        $region15: #{tpu_custom_call.1} parent=11 // pred_region
          %157 = vsyncadd [#allocation6], 0
          %s158 = smul.addr %s28, 2
          %s159 = scalar_lea.hbm %s2, %s158
          %s160 = sshll.u32 %s159, 4
          %s161 = int_to_ptr.hbm [resolvable:$true] %s160
          %s162 = sshll.u32 [#allocation7], 4
          %s163 = int_to_ptr.vmem [resolvable:$true] %s162
          %168 = dma.hbm_to_vmem [thread:$0]  %s161, 288, %s163, [#allocation6], 32, 32, 2
        $region16: #{tpu_custom_call.1} parent=11 // pred_fallthru
          _
      $region12: #{tpu_custom_call.1} parent=5 // pred_fallthru
        _
      %p169 = scmp.lt.s32.totalorder %s18, 2
      // Predicated region
      $region17: #{tpu_custom_call.1} parent=5 // pred_check
        %p170 = pneg %p169
      $region18: #{tpu_custom_call.1} parent=5 // pred_check_branch
        %172 = sbr.rel (%p170) target = $region20
      $region19: #{tpu_custom_call.1} parent=5 // pred_region
        // Predicated region
        $region21: #{tpu_custom_call.1} parent=19 // pred_check
          %p173 = pneg %p50
        $region22: #{tpu_custom_call.1} parent=19 // pred_check_branch
          %175 = sbr.rel (%p173) target = $region24
        $region23: #{tpu_custom_call.1} parent=19 // pred_region
          %s176 = sand.u32 %s40, 1
          %s177 = scalar_lea.sflag [#allocation3], %s176
          %s178 = sand.u32 %s40, 1
          %s179 = smul.addr %s178, 16
          %s180 = scalar_lea.vmem [#allocation2], %s179
          %182 = vsyncadd %s177, 0
          %s183 = smul.addr %s25, 8
          %s184 = smul.addr %s183, 2
          %s185 = scalar_lea.hbm %s0, %s184
          %s186 = sshll.u32 %s185, 4
          %s187 = int_to_ptr.hbm [resolvable:$true] %s186
          %s188 = sshll.u32 %s180, 4
          %s189 = int_to_ptr.vmem [resolvable:$true] %s188
          %194 = dma.hbm_to_vmem [thread:$0]  %s187, 256, %s189, %s177, 64, 64, 4
        $region24: #{tpu_custom_call.1} parent=19 // pred_fallthru
          _
        // Predicated region
        $region25: #{tpu_custom_call.1} parent=19 // pred_check
          %p195 = pneg %p78
        $region26: #{tpu_custom_call.1} parent=19 // pred_check_branch
          %197 = sbr.rel (%p195) target = $region28
        $region27: #{tpu_custom_call.1} parent=19 // pred_region
          %s198 = sand.u32 %s18, 1
          %s199 = scalar_lea.sflag [#allocation6], %s198
          %s200 = sand.u32 %s68, 1
          %s201 = smul.addr %s200, 4
          %s202 = scalar_lea.vmem [#allocation5], %s201
          %204 = vsyncadd %s199, 0
          %s205 = sadd.s32 %s26, %s25
          %s206 = smul.addr %s205, 4
          %s207 = scalar_lea.hbm %s1, %s206
          %s209 = sshll.u32 %s207, 4
          %s210 = int_to_ptr.hbm [resolvable:$true] %s209
          %s211 = sshll.u32 %s202, 4
          %s212 = int_to_ptr.vmem [resolvable:$true] %s211
          %214 = dma.hbm_to_vmem [thread:$0]  %s210, 64, %s212, %s199
        $region28: #{tpu_custom_call.1} parent=19 // pred_fallthru
          _
      $region20: #{tpu_custom_call.1} parent=5 // pred_fallthru
        _
      %p215 = scmp.le.s32.totalorder 1, %s18
      %p216 = scmp.lt.s32.totalorder %s18, 3
      %p217 = pnand %p215, %p216
      %p218 = pneg %p217
      // Predicated region
      $region29: #{tpu_custom_call.1} parent=5 // pred_check
        _
      $region30: #{tpu_custom_call.1} parent=5 // pred_check_branch
        %220 = sbr.rel (%p217) target = $region32
      $region31: #{tpu_custom_call.1} parent=5 // pred_region
        %s221 = ssub.s32 %s18, 1
        %s222 = sand.u32 %s43, 1
        %s223 = scalar_lea.sflag [#allocation3], %s222
        %s224 = sand.u32 %s43, 1
        %s225 = smul.addr %s224, 16
        %s226 = scalar_lea.vmem [#allocation2], %s225
        // Predicated region
        $region33: #{tpu_custom_call.1} parent=31 // pred_check
          %p227 = pneg %p56
        $region34: #{tpu_custom_call.1} parent=31 // pred_check_branch
          %229 = sbr.rel (%p227) target = $region36
        $region35: #{tpu_custom_call.1} parent=31 // pred_region
          %231 = dma.done %s223, 256
        $region36: #{tpu_custom_call.1} parent=31 // pred_fallthru
          _
        %s232 = sand.u32 %s23, 1
        %s233 = scalar_lea.sflag [#allocation6], %s232
        %s234 = sand.u32 %s71, 1
        %s235 = smul.addr %s234, 4
        %s236 = scalar_lea.vmem [#allocation5], %s235
        // Predicated region
        $region37: #{tpu_custom_call.1} parent=31 // pred_check
          %p237 = pneg %p84
        $region38: #{tpu_custom_call.1} parent=31 // pred_check_branch
          %239 = sbr.rel (%p237) target = $region40
        $region39: #{tpu_custom_call.1} parent=31 // pred_region
          %241 = dma.done %s233, 64
        $region40: #{tpu_custom_call.1} parent=31 // pred_fallthru
          _
        // Predicated region
        $region41: #{tpu_custom_call.1} parent=31 // pred_check
          %p242 = pneg %p110
        $region42: #{tpu_custom_call.1} parent=31 // pred_check_branch
          %244 = sbr.rel (%p242) target = $region44
        $region43: #{tpu_custom_call.1} parent=31 // pred_region
          %246 = dma.done [#allocation6], 288
        $region44: #{tpu_custom_call.1} parent=31 // pred_fallthru
          _
        %s247 = sand.u32 %s43, 1
        %s248 = scalar_lea.sflag [#allocation3], %s247
        %s249 = sand.u32 %s43, 1
        %s250 = smul.addr %s249, 16
        %s251 = scalar_lea.vmem [#allocation2], %s250
        %p252 = pneg %p56
        %p253 = pneg %p53
        %s254 = sand.u32 %s23, 1
        %s255 = scalar_lea.sflag [#allocation6], %s254
        %s256 = sand.u32 %s71, 1
        %s257 = smul.addr %s256, 4
        %s258 = scalar_lea.vmem [#allocation5], %s257
        %p259 = pneg %p84
        %p260 = pneg %p81
        %p261 = pneg %p110
        %p262 = pneg %p107
        %p263 = pneg %p138
        %p264 = pneg %p135
        %s265 = sand.u32 %s125, 1
        %s266 = scalar_lea.sflag [#allocation4], %s265
        %s267 = sand.u32 %s125, 1
        %s268 = smul.addr %s267, 4
        %s269 = scalar_lea.vmem [#allocation8], %s268
        %v271 = vld [vmem:[%s236] sm:$0xf]
        %v272 = vld [vmem:[%s226] sm:$0xf]
        %s273 = scalar_lea.vmem %s226, 4 [#allocation2]
        %v274 = vld [vmem:[%s273] sm:$0xf]
        %s275 = scalar_lea.vmem %s226, 8 [#allocation2]
        %v276 = vld [vmem:[%s275] sm:$0xf]
        %s277 = scalar_lea.vmem %s226, 12 [#allocation2]
        %v278 = vld [vmem:[%s277] sm:$0xf]
        %v279 = vld [vmem:[#allocation7] sm:$0x3]
        %vm280 = vcmask 31744
        %v282 = vsel %vm280, %v279, 0
        %vm284 = vcmask 1041408
        %v286 = vsel %vm284, %v272, 0
        %288 = vmatpush.bf16.msra.mxu0 0
        %289 = vmatpush.bf16.msra.mxu0 0
        %290 = vmatpush.bf16.msra.mxu0 0
        %291 = vmatpush.bf16.msra.mxu0 0
        %292 = vmatpush.bf16.msra.mxu0 0
        %293 = vmatpush.bf16.msra.mxu0 0
        %294 = vmatpush.bf16.msra.mxu0 0
        %295 = vmatpush.bf16.msra.mxu0 %v286
        %296 = vmatmul.bf16.gmra.mxu0 %v282
        %v297 = vpop.f32.mrf.mxu0
        %v298 = vadd.f32 0.0, %v297
        %v299 = vpop.f32.mrf.mxu0
        %300 = vdwg.mxu0
        %v301 = vadd.f32 %v271, %v298
        %s302 = scalar_lea.vmem [#allocation7], 2
        %v303 = vld [vmem:[%s302] sm:$0x3]
        %v305 = vsel %vm280, %v303, 0
        %v308 = vsel %vm284, %v274, 0
        %310 = vmatpush.bf16.msra.mxu0 0
        %311 = vmatpush.bf16.msra.mxu0 0
        %312 = vmatpush.bf16.msra.mxu0 0
        %313 = vmatpush.bf16.msra.mxu0 0
        %314 = vmatpush.bf16.msra.mxu0 0
        %315 = vmatpush.bf16.msra.mxu0 0
        %316 = vmatpush.bf16.msra.mxu0 0
        %317 = vmatpush.bf16.msra.mxu0 %v308
        %318 = vmatmul.bf16.gmra.mxu0 %v305
        %v319 = vpop.f32.mrf.mxu0
        %v320 = vadd.f32 0.0, %v319
        %v321 = vpop.f32.mrf.mxu0
        %322 = vdwg.mxu0
        %v323 = vadd.f32 %v301, %v320
        %s324 = scalar_lea.vmem [#allocation7], 4
        %v325 = vld [vmem:[%s324] sm:$0x3]
        %326 = vst [vmem:[#allocation1] ss:$4 sm:$0xff] %v272
        %v327 = vld.sshfl [vmem:[#allocation1] sm:$0xff pattern:$0x73625140]
        %v329 = vld.sshfl [vmem:[#allocation1 + $0x8] sm:$0xff pattern:$0x73625140]
        %331 = vrot.lane.b32.xlu0 %v327, 127
        %v332 = vpop.permute.xlu0 %331
        %333 = vrot.lane.b32.xlu0 %v329, 127
        %v334 = vpop.permute.xlu0 %333
        %vm335 = vcmask 1039360
        %v336 = vsel %vm335, %v332, %v334
        %v338 = vsel %vm280, %v325, 0
        %v341 = vsel %vm284, %v336, 0
        %343 = vmatpush.bf16.msra.mxu0 0
        %344 = vmatpush.bf16.msra.mxu0 0
        %345 = vmatpush.bf16.msra.mxu0 0
        %346 = vmatpush.bf16.msra.mxu0 0
        %347 = vmatpush.bf16.msra.mxu0 0
        %348 = vmatpush.bf16.msra.mxu0 0
        %349 = vmatpush.bf16.msra.mxu0 0
        %350 = vmatpush.bf16.msra.mxu0 %v341
        %351 = vmatmul.bf16.gmra.mxu0 %v338
        %v352 = vpop.f32.mrf.mxu0
        %v353 = vadd.f32 0.0, %v352
        %v354 = vpop.f32.mrf.mxu0
        %355 = vdwg.mxu0
        %v356 = vadd.f32 %v323, %v353
        %s357 = scalar_lea.vmem [#allocation7], 6
        %v358 = vld [vmem:[%s357] sm:$0x3]
        %v360 = vsel %vm280, %v358, 0
        %v363 = vsel %vm284, %v276, 0
        %365 = vmatpush.bf16.msra.mxu0 0
        %366 = vmatpush.bf16.msra.mxu0 0
        %367 = vmatpush.bf16.msra.mxu0 0
        %368 = vmatpush.bf16.msra.mxu0 0
        %369 = vmatpush.bf16.msra.mxu0 0
        %370 = vmatpush.bf16.msra.mxu0 0
        %371 = vmatpush.bf16.msra.mxu0 0
        %372 = vmatpush.bf16.msra.mxu0 %v363
        %373 = vmatmul.bf16.gmra.mxu0 %v360
        %v374 = vpop.f32.mrf.mxu0
        %v375 = vadd.f32 0.0, %v374
        %v376 = vpop.f32.mrf.mxu0
        %377 = vdwg.mxu0
        %v378 = vadd.f32 %v356, %v375
        %s379 = scalar_lea.vmem [#allocation7], 8
        %v380 = vld [vmem:[%s379] sm:$0x3]
        %v382 = vsel %vm280, %v380, 0
        %v385 = vsel %vm284, %v278, 0
        %387 = vmatpush.bf16.msra.mxu0 0
        %388 = vmatpush.bf16.msra.mxu0 0
        %389 = vmatpush.bf16.msra.mxu0 0
        %390 = vmatpush.bf16.msra.mxu0 0
        %391 = vmatpush.bf16.msra.mxu0 0
        %392 = vmatpush.bf16.msra.mxu0 0
        %393 = vmatpush.bf16.msra.mxu0 0
        %394 = vmatpush.bf16.msra.mxu0 %v385
        %395 = vmatmul.bf16.gmra.mxu0 %v382
        %v396 = vpop.f32.mrf.mxu0
        %v397 = vadd.f32 0.0, %v396
        %v398 = vpop.f32.mrf.mxu0
        %399 = vdwg.mxu0
        %v400 = vadd.f32 %v378, %v397
        %s401 = scalar_lea.vmem [#allocation7], 10
        %v402 = vld [vmem:[%s401] sm:$0x3]
        %403 = vst [vmem:[#allocation1] ss:$4 sm:$0xff] %v276
        %v404 = vld.sshfl [vmem:[#allocation1] sm:$0xff pattern:$0x73625140]
        %v406 = vld.sshfl [vmem:[#allocation1 + $0x8] sm:$0xff pattern:$0x73625140]
        %408 = vrot.lane.b32.xlu0 %v404, 127
        %v409 = vpop.permute.xlu0 %408
        %410 = vrot.lane.b32.xlu0 %v406, 127
        %v411 = vpop.permute.xlu0 %410
        %v412 = vsel %vm335, %v409, %v411
        %v414 = vsel %vm280, %v402, 0
        %v417 = vsel %vm284, %v412, 0
        %419 = vmatpush.bf16.msra.mxu0 0
        %420 = vmatpush.bf16.msra.mxu0 0
        %421 = vmatpush.bf16.msra.mxu0 0
        %422 = vmatpush.bf16.msra.mxu0 0
        %423 = vmatpush.bf16.msra.mxu0 0
        %424 = vmatpush.bf16.msra.mxu0 0
        %425 = vmatpush.bf16.msra.mxu0 0
        %426 = vmatpush.bf16.msra.mxu0 %v417
        %427 = vmatmul.bf16.gmra.mxu0 %v414
        %v428 = vpop.f32.mrf.mxu0
        %v429 = vadd.f32 0.0, %v428
        %v430 = vpop.f32.mrf.mxu0
        %431 = vdwg.mxu0
        %v432 = vadd.f32 %v400, %v429
        %s433 = scalar_lea.vmem [#allocation7], 12
        %v434 = vld [vmem:[%s433] sm:$0x3]
        %435 = vst [vmem:[#allocation1] ss:$4 sm:$0xff] %v272
        %v436 = vld.sshfl [vmem:[#allocation1] sm:$0xff pattern:$0x73625140]
        %v438 = vld.sshfl [vmem:[#allocation1 + $0x8] sm:$0xff pattern:$0x73625140]
        %440 = vrot.lane.b32.xlu0 %v436, 119
        %v441 = vpop.permute.xlu0 %440
        %442 = vrot.lane.b32.xlu0 %v438, 119
        %v443 = vpop.permute.xlu0 %442
        %vm444 = vcmask 973824
        %v445 = vsel %vm444, %v441, %v443
        %v447 = vsel %vm280, %v434, 0
        %v450 = vsel %vm284, %v445, 0
        %452 = vmatpush.bf16.msra.mxu0 0
        %453 = vmatpush.bf16.msra.mxu0 0
        %454 = vmatpush.bf16.msra.mxu0 0
        %455 = vmatpush.bf16.msra.mxu0 0
        %456 = vmatpush.bf16.msra.mxu0 0
        %457 = vmatpush.bf16.msra.mxu0 0
        %458 = vmatpush.bf16.msra.mxu0 0
        %459 = vmatpush.bf16.msra.mxu0 %v450
        %460 = vmatmul.bf16.gmra.mxu0 %v447
        %v461 = vpop.f32.mrf.mxu0
        %v462 = vadd.f32 0.0, %v461
        %v463 = vpop.f32.mrf.mxu0
        %464 = vdwg.mxu0
        %v465 = vadd.f32 %v432, %v462
        %s466 = scalar_lea.vmem [#allocation7], 14
        %v467 = vld [vmem:[%s466] sm:$0x3]
        %468 = vst [vmem:[#allocation1] ss:$4 sm:$0xff] %v274
        %v469 = vld.sshfl [vmem:[#allocation1] sm:$0xff pattern:$0x73625140]
        %v471 = vld.sshfl [vmem:[#allocation1 + $0x8] sm:$0xff pattern:$0x73625140]
        %473 = vrot.lane.b32.xlu0 %v469, 119
        %v474 = vpop.permute.xlu0 %473
        %475 = vrot.lane.b32.xlu0 %v471, 119
        %v476 = vpop.permute.xlu0 %475
        %v477 = vsel %vm444, %v474, %v476
        %v479 = vsel %vm280, %v467, 0
        %v482 = vsel %vm284, %v477, 0
        %484 = vmatpush.bf16.msra.mxu0 0
        %485 = vmatpush.bf16.msra.mxu0 0
        %486 = vmatpush.bf16.msra.mxu0 0
        %487 = vmatpush.bf16.msra.mxu0 0
        %488 = vmatpush.bf16.msra.mxu0 0
        %489 = vmatpush.bf16.msra.mxu0 0
        %490 = vmatpush.bf16.msra.mxu0 0
        %491 = vmatpush.bf16.msra.mxu0 %v482
        %492 = vmatmul.bf16.gmra.mxu0 %v479
        %v493 = vpop.f32.mrf.mxu0
        %v494 = vadd.f32 0.0, %v493
        %v495 = vpop.f32.mrf.mxu0
        %496 = vdwg.mxu0
        %v497 = vadd.f32 %v465, %v494
        %s498 = scalar_lea.vmem [#allocation7], 16
        %v499 = vld [vmem:[%s498] sm:$0x3]
        %500 = vst [vmem:[#allocation1] ss:$4 sm:$0xff] %v272
        %v501 = vld.sshfl [vmem:[#allocation1] sm:$0xff pattern:$0x73625140]
        %v503 = vld.sshfl [vmem:[#allocation1 + $0x8] sm:$0xff pattern:$0x73625140]
        %505 = vrot.lane.b32.xlu0 %v501, 118
        %v506 = vpop.permute.xlu0 %505
        %507 = vrot.lane.b32.xlu0 %v503, 118
        %v508 = vpop.permute.xlu0 %507
        %vm509 = vcmask 965632
        %v510 = vsel %vm509, %v506, %v508
        %v512 = vsel %vm280, %v499, 0
        %v515 = vsel %vm284, %v510, 0
        %517 = vmatpush.bf16.msra.mxu0 0
        %518 = vmatpush.bf16.msra.mxu0 0
        %519 = vmatpush.bf16.msra.mxu0 0
        %520 = vmatpush.bf16.msra.mxu0 0
        %521 = vmatpush.bf16.msra.mxu0 0
        %522 = vmatpush.bf16.msra.mxu0 0
        %523 = vmatpush.bf16.msra.mxu0 0
        %524 = vmatpush.bf16.msra.mxu0 %v515
        %525 = vmatmul.bf16.gmra.mxu0 %v512
        %v526 = vpop.f32.mrf.mxu0
        %v527 = vadd.f32 0.0, %v526
        %v528 = vpop.f32.mrf.mxu0
        %529 = vdwg.mxu0
        %v530 = vadd.f32 %v497, %v527
        %v531 = vadd.f32 %v530, %v530
        %532 = vst [vmem:[%s269] sm:$0xf] %v531
        %s533 = sand.u32 %s125, 1
        %s534 = scalar_lea.sflag [#allocation4], %s533
        %s535 = sand.u32 %s125, 1
        %s536 = smul.addr %s535, 4
        %s537 = scalar_lea.vmem [#allocation8], %s536
        // Predicated region
        $region45: #{tpu_custom_call.1} parent=31 // pred_check
          %p538 = pneg %p135
        $region46: #{tpu_custom_call.1} parent=31 // pred_check_branch
          %540 = sbr.rel (%p538) target = $region48
        $region47: #{tpu_custom_call.1} parent=31 // pred_region
          %542 = vsyncadd %s534, 0
          %s543 = sadd.s32 %s28, %s27
          %s544 = smul.addr %s543, 4
          %s545 = scalar_lea.hbm %s3, %s544
          %s547 = sshll.u32 %s537, 4
          %s548 = int_to_ptr.vmem [resolvable:$true] %s547
          %s549 = sshll.u32 %s545, 4
          %s550 = int_to_ptr.hbm [resolvable:$true] %s549
          %552 = dma.vmem_to_hbm [thread:$0]  %s548, 64, %s550, %s534
        $region48: #{tpu_custom_call.1} parent=31 // pred_fallthru
          _
      $region32: #{tpu_custom_call.1} parent=5 // pred_fallthru
        _
      %p553 = scmp.le.s32.totalorder 2, %s18
      // Predicated region
      $region49: #{tpu_custom_call.1} parent=5 // pred_check
        %p554 = pneg %p553
      $region50: #{tpu_custom_call.1} parent=5 // pred_check_branch
        %556 = sbr.rel (%p554) target = $region52
      $region51: #{tpu_custom_call.1} parent=5 // pred_region
        %s557 = ssub.s32 %s18, 2
        // Predicated region
        $region53: #{tpu_custom_call.1} parent=51 // pred_check
          %p558 = pneg %p141
        $region54: #{tpu_custom_call.1} parent=51 // pred_check_branch
          %560 = sbr.rel (%p558) target = $region56
        $region55: #{tpu_custom_call.1} parent=51 // pred_region
          %s561 = sand.u32 %s126, 1
          %s562 = scalar_lea.sflag [#allocation4], %s561
          %s563 = sand.u32 %s126, 1
          %s564 = smul.addr %s563, 4
          %s565 = scalar_lea.vmem [#allocation8], %s564
          %567 = dma.done %s562, 64
        $region56: #{tpu_custom_call.1} parent=51 // pred_fallthru
          _
      $region52: #{tpu_custom_call.1} parent=5 // pred_fallthru
        _
    $region6: #{tpu_custom_call.1} parent=1 // loop_footer
      %s22 = sadd.s32 1, %s18
    $region7: #{tpu_custom_call.1} parent=1 // loop_footer_branch
      %17 = sbr.rel target = $region3
    $region8: #{tpu_custom_call.1} parent=1 // loop_exit
      _
    %568 = vsyncpa [#allocation3], 1
    %s569 = scalar_lea.sflag [#allocation3], 1
    %570 = vsyncpa %s569, 1
    %571 = vsyncpa [#allocation6], 1
    %s572 = scalar_lea.sflag [#allocation6], 1
    %573 = vsyncpa %s572, 1
    %574 = vsyncpa [#allocation4], 1
    %s575 = scalar_lea.sflag [#allocation4], 1
    %576 = vsyncpa %s575, 1

</llo_original>
